<compile_context>
chip_gen: v5e
topology: v5e:2x2
jax: 0.10.0
libtpu: 0.0.40
codegen_flags: <defaults>
</compile_context>

<pallas_src>
import numpy as np
import jax
import jax.numpy as jnp
from jax.experimental import pallas as pl
from jax.experimental.pallas import tpu as pltpu


# ----------------------------------------------------------------------------
# helpers
# ----------------------------------------------------------------------------
def _round_up(x, m):
    return ((x + m - 1) // m) * m


def _pad2(w, rows, cols):
    r, c = w.shape
    return jnp.pad(w, ((0, rows - r), (0, cols - c)))


# ----------------------------------------------------------------------------
# Linear (matmul + bias + fused activation), M/K tiled, accumulate into o_ref.
#   x: [M, K] f32, w: [K, D] bf16 (D % 128 == 0), b: [D] f32  ->  [M, D] f32
# ----------------------------------------------------------------------------
def _make_linear_kernel(activation):
    def kernel(x_ref, w_ref, b_ref, o_ref):
        k = pl.program_id(1)

        @pl.when(k == 0)
        def _():
            o_ref[...] = jnp.zeros_like(o_ref)

        # bf16 MXU operands, f32 accumulation directly in the output block.
        o_ref[...] += jnp.dot(
            x_ref[...].astype(jnp.bfloat16),
            w_ref[...],
            preferred_element_type=jnp.float32,
        )

        @pl.when(k == pl.num_programs(1) - 1)
        def _():
            y = o_ref[...] + b_ref[...]
            if activation == "relu":
                y = jnp.maximum(y, 0.0)
            elif activation == "tanh":
                y = jnp.tanh(y)
            o_ref[...] = y

    return kernel


def pallas_linear(x, w_bf16, b, activation="none", tm=512, tk=512):
    M, K = x.shape
    Kw, D = w_bf16.shape
    assert K == Kw and D % 128 == 0
    if M % tm != 0 or tm % 8 != 0:
        tm = M                      # full-M block (allowed: equals array dim)
    if K % tk != 0 or tk % 128 != 0:
        tk = K
    b2 = b.reshape(1, D).astype(jnp.float32)
    grid = (M // tm, K // tk)       # reduction axis (K) innermost / last
    return pl.pallas_call(
        _make_linear_kernel(activation),
        out_shape=jax.ShapeDtypeStruct((M, D), jnp.float32),
        grid_spec=pltpu.PrefetchScalarGridSpec(
            num_scalar_prefetch=0,
            grid=grid,
            in_specs=[
                pl.BlockSpec((tm, tk), lambda m, k: (m, k)),
                pl.BlockSpec((tk, D), lambda m, k: (k, 0)),
                pl.BlockSpec((1, D), lambda m, k: (0, 0)),
            ],
            out_specs=pl.BlockSpec((tm, D), lambda m, k: (m, 0)),
        ),
        compiler_params=pltpu.CompilerParams(
            dimension_semantics=("parallel", "arbitrary"),
            vmem_limit_bytes=48 * 1024 * 1024,
        ),
    )(x, w_bf16, b2)


# ----------------------------------------------------------------------------
# Fused joint kernel: per (batch n, T-tile t)
#   enc_proj = enc @ W_je            (TT, HJp)
#   pred_proj = pred @ W_jp + b_j    (Up, HJp)
#   logits   = tanh(enc_proj[:,None,:] + pred_proj[None,:,:]) @ W_out + b_out
# All lane dims padded to 128, Up a multiple of 8 -> aligned reshapes,
# lane-dense stores; vocab/U padding sliced off outside.
# ----------------------------------------------------------------------------
def _joint_kernel(enc_ref, pred_ref, wje_ref, wjp_ref, bj_ref, wout_ref,
                  bout_ref, o_ref):
    tt = enc_ref.shape[0]
    up = pred_ref.shape[0]

    ep = jnp.dot(enc_ref[...].astype(jnp.bfloat16), wje_ref[...],
                 preferred_element_type=jnp.float32)              # (TT, HJp)
    pp = jnp.dot(pred_ref[...].astype(jnp.bfloat16), wjp_ref[...],
                 preferred_element_type=jnp.float32) + bj_ref[...]  # (Up, HJp)

    h = jnp.tanh(ep[:, None, :] + pp[None, :, :])                 # (TT, Up, HJp)
    hb = h.reshape(tt * up, -1).astype(jnp.bfloat16)              # tile-aligned
    logits = jnp.dot(hb, wout_ref[...],
                     preferred_element_type=jnp.float32) + bout_ref[...]
    o_ref[0] = logits.reshape(tt, up, -1)                         # (TT, Up, Vp)


def pallas_joint(enc_out, pred_out, w_je, w_jp, b_j, w_out, b_out, tt=64):
    """enc_out: [T, N, Dp] (natural encoder layout, NOT transposed),
       pred_out: [N, Up, Dp]  ->  padded joint output [N, T, Up, Vp]."""
    T, N, Dp = enc_out.shape
    _, Up, _ = pred_out.shape
    HJp = w_je.shape[1]
    Vp = w_out.shape[1]
    assert Dp % 128 == 0 and HJp % 128 == 0 and Vp % 128 == 0 and Up % 8 == 0
    if T % tt != 0 or tt % 8 != 0:
        tt = T

    # Metadata-only reshapes: index [T, N, Dp] / [N, Up, Dp] without HBM passes.
    enc2 = enc_out.reshape(T, N * Dp)       # column block n -> enc_out[:, n, :]
    pred2 = pred_out.reshape(N * Up, Dp)    # row block n    -> pred_out[n]
    bj2 = b_j.reshape(1, HJp)
    bo2 = b_out.reshape(1, Vp)

    grid = (N, T // tt)
    return pl.pallas_call(
        _joint_kernel,
        out_shape=jax.ShapeDtypeStruct((N, T, Up, Vp), jnp.float32),
        grid_spec=pltpu.PrefetchScalarGridSpec(
            num_scalar_prefetch=0,
            grid=grid,
            in_specs=[
                pl.BlockSpec((tt, Dp), lambda n, t: (t, n)),
                pl.BlockSpec((Up, Dp), lambda n, t: (n, 0)),
                pl.BlockSpec((Dp, HJp), lambda n, t: (0, 0)),
                pl.BlockSpec((Dp, HJp), lambda n, t: (0, 0)),
                pl.BlockSpec((1, HJp), lambda n, t: (0, 0)),
                pl.BlockSpec((HJp, Vp), lambda n, t: (0, 0)),
                pl.BlockSpec((1, Vp), lambda n, t: (0, 0)),
            ],
            out_specs=pl.BlockSpec((1, tt, Up, Vp), lambda n, t: (n, t, 0, 0)),
        ),
        compiler_params=pltpu.CompilerParams(
            dimension_semantics=("parallel", "parallel"),
            vmem_limit_bytes=48 * 1024 * 1024,
        ),
    )(enc2, pred2, w_je, w_jp, bj2, w_out, bo2)


# ----------------------------------------------------------------------------
# SLRTransducer forward (synthetic encoder / predictor / joint_net params).
# ----------------------------------------------------------------------------
class SLRTransducerPallas:
    def __init__(self, C, H, W, D=32, HJ=32, V=16, blank_idx=0, key=None):
        self.blank_idx = blank_idx
        self.D, self.HJ, self.V = D, HJ, V
        # lane-dense padded dims used by the kernels (zero-padded weights).
        self.Dp = _round_up(D, 128)
        self.HJp = _round_up(HJ, 128)
        self.Vp = _round_up(V, 128)
        F = C * H * W
        key = key if key is not None else jax.random.PRNGKey(42)
        ks = jax.random.split(key, 8)
        s = 0.02

        # logical parameters (mirror the torch-module structure)
        w_enc = jax.random.normal(ks[0], (F, D), jnp.float32) * s
        embed = jax.random.normal(ks[1], (V, D), jnp.float32) * s
        w_pred = jax.random.normal(ks[2], (D, D), jnp.float32) * s
        w_je = jax.random.normal(ks[3], (D, HJ), jnp.float32) * s
        w_jp = jax.random.normal(ks[4], (D, HJ), jnp.float32) * s
        w_out = jax.random.normal(ks[5], (HJ, V), jnp.float32) * s

        # padded + bf16 copies consumed on the MXU (biases are zero -> padded).
        self.w_enc_p = _pad2(w_enc, F, self.Dp).astype(jnp.bfloat16)
        self.b_enc_p = jnp.zeros((self.Dp,), jnp.float32)
        self.embed_p = _pad2(embed, V, self.Dp)                 # gather source
        self.w_pred_p = _pad2(w_pred, self.Dp, self.Dp).astype(jnp.bfloat16)
        self.b_pred_p = jnp.zeros((self.Dp,), jnp.float32)
        self.w_je_p = _pad2(w_je, self.Dp, self.HJp).astype(jnp.bfloat16)
        self.w_jp_p = _pad2(w_jp, self.Dp, self.HJp).astype(jnp.bfloat16)
        self.b_j_p = jnp.zeros((self.HJp,), jnp.float32)        # b_je + b_jp
        self.w_out_p = _pad2(w_out, self.HJp, self.Vp).astype(jnp.bfloat16)
        self.b_out_p = jnp.zeros((self.Vp,), jnp.float32)

    # -- glue reproducing SLRTransducer._target_transform (host side)
    @staticmethod
    def _target_transform(target_np, target_length_np):
        N = target_length_np.shape[0]
        max_u = int(target_length_np.max())
        out = np.zeros((N, max_u), dtype=np.int32)
        start = 0
        for i, length in enumerate(target_length_np.astype(np.int32)):
            out[i, :length] = target_np[start:start + length]
            start += length
        return jnp.asarray(out)

    def _cat_target(self, target, target_length):
        n = target.shape[0]
        start_tok = jnp.full((n, 1), self.blank_idx, jnp.int32)
        return jnp.concatenate([start_tok, target], axis=-1), target_length + 1

    def encoder(self, video, video_length):
        T, N, C, H, W = video.shape
        x = video.reshape(T * N, C * H * W)
        # relu fused into the linear epilogue; output stays [T, N, Dp] (no transpose).
        feat = pallas_linear(x, self.w_enc_p, self.b_enc_p,
                             activation="relu", tm=512, tk=256)
        return dict(out=feat.reshape(T, N, self.Dp), video_length=video_length)

    def predictor(self, cat_target, target_length=None):
        # TODO(synk): the original predictor is an injected recurrent module
        # (returns hidden state in _decode); a feed-forward predictor stands in here.
        N, U = cat_target.shape
        Up = _round_up(U, 8)                       # sublane-aligned U
        if Up != U:
            cat_target = jnp.pad(cat_target, ((0, 0), (0, Up - U)),
                                 constant_values=self.blank_idx)
        emb = jnp.take(self.embed_p, cat_target, axis=0)      # [N, Up, Dp] gather (glue)
        out = pallas_linear(emb.reshape(N * Up, self.Dp),
                            self.w_pred_p, self.b_pred_p, activation="tanh")
        return dict(out=out.reshape(N, Up, self.Dp), hidden=None)

    def joint_net(self, enc_out, pred_out):
        # enc_out: [T, N, Dp], pred_out: [N, Up, Dp] -> padded [N, T, Up, Vp]
        return pallas_joint(enc_out, pred_out, self.w_je_p, self.w_jp_p,
                            self.b_j_p, self.w_out_p, self.b_out_p, tt=64)

    def forward(self, video, video_length, target, target_length_np):
        enc_out = self.encoder(video, video_length)
        transformed = self._target_transform(np.asarray(target), target_length_np)
        cat_target, tl = self._cat_target(
            transformed, jnp.asarray(target_length_np, jnp.int32))
        U = cat_target.shape[1]
        pred_out = self.predictor(cat_target, tl)
        joint_padded = self.joint_net(enc_out["out"], pred_out["out"])
        joint = joint_padded[:, :, :U, :self.V]   # strip U / vocab padding
        return dict(
            out=joint,
            video_length=enc_out["video_length"],
            transformed_target=transformed,
        )


# ----------------------------------------------------------------------------
# pure-JAX reference (same padded bf16 weights) for a correctness sanity check
# ----------------------------------------------------------------------------
def _reference_joint(model, video, cat_target):
    T, N, C, H, W = video.shape
    x = video.reshape(T * N, C * H * W).astype(jnp.bfloat16)
    enc = jnp.maximum(
        jnp.dot(x, model.w_enc_p, preferred_element_type=jnp.float32), 0.0)
    enc = enc.reshape(T, N, model.Dp)
    emb = jnp.take(model.embed_p, cat_target, axis=0).astype(jnp.bfloat16)
    pred = jnp.tanh(jnp.dot(emb, model.w_pred_p,
                            preferred_element_type=jnp.float32))
    ep = jnp.dot(enc.astype(jnp.bfloat16), model.w_je_p,
                 preferred_element_type=jnp.float32)            # [T, N, HJp]
    pp = jnp.dot(pred.astype(jnp.bfloat16), model.w_jp_p,
                 preferred_element_type=jnp.float32)            # [N, U, HJp]
    h = jnp.tanh(ep[:, :, None, :] + pp[None, :, :, :])         # [T, N, U, HJp]
    logits = jnp.dot(h.astype(jnp.bfloat16), model.w_out_p,
                     preferred_element_type=jnp.float32)        # [T, N, U, Vp]
    return jnp.transpose(logits, (1, 0, 2, 3))[..., :model.V]   # [N, T, U, V]


if __name__ == "__main__":
    key = jax.random.PRNGKey(0)
    T, N, C, H, W = 8, 2, 4, 16, 16
    V = 16

    k_v, k_t, k_p = jax.random.split(key, 3)
    video = jax.random.normal(k_v, (T, N, C, H, W), jnp.float32)
    video_length = jnp.array([T, T], jnp.int32)

    target_length_np = np.array([3, 5], dtype=np.int32)          # per-batch label lens
    total = int(target_length_np.sum())
    target = np.asarray(
        jax.random.randint(k_t, (total,), 1, V, jnp.int32)       # non-blank labels
    )

    model = SLRTransducerPallas(C, H, W, D=32, HJ=32, V=V, key=k_p)
    out = model.forward(video, video_length, target, target_length_np)

    joint = jax.block_until_ready(out["out"])
    U = int(target_length_np.max()) + 1
    assert joint.shape == (N, T, U, V), joint.shape
    assert out["transformed_target"].shape == (N, U - 1)
    assert bool(jnp.all(jnp.isfinite(joint)))

    # numerical sanity vs pure-JAX reference using the same bf16 weights
    cat_target = jnp.concatenate(
        [jnp.zeros((N, 1), jnp.int32), out["transformed_target"]], axis=-1)
    ref = jax.block_until_ready(_reference_joint(model, video, cat_target))
    np.testing.assert_allclose(np.asarray(joint), np.asarray(ref),
                               rtol=2e-2, atol=1e-3)

    print("KERNEL_OK")
</pallas_src>

<mosaic_0001>
module attributes {stable_mosaic.version = 11 : i64} {
  func.func @kernel(%arg0: i32, %arg1: i32, %arg2: memref<16x256xf32, #tpu.memory_space<vmem>>, %arg3: memref<256x128xbf16, #tpu.memory_space<vmem>>, %arg4: memref<1x128xf32, #tpu.memory_space<vmem>>, %arg5: memref<16x128xf32, #tpu.memory_space<vmem>>) attributes {dimension_semantics = [#tpu.dimension_semantics<parallel>, #tpu.dimension_semantics<arbitrary>], iteration_bounds = array<i64: 1, 4>, scalar_prefetch = 0 : i64, scratch_operands = 0 : i64, tpu.core_type = #tpu.core_type<tc>, window_params = [{transform_indices = @transform_0, window_bounds = array<i64: 16, 256>}, {transform_indices = @transform_1, window_bounds = array<i64: 256, 128>}, {pipeline_mode = #tpu.pipeline_mode<synchronous>, transform_indices = @transform_2, window_bounds = array<i64: 1, 128>}, {transform_indices = @transform_3, window_bounds = array<i64: 16, 128>}]} {
    %c0_i32 = arith.constant 0 : i32
    %0 = arith.cmpi eq, %arg1, %c0_i32 : i32
    %1 = arith.extui %0 : i1 to i32
    %c0_i32_0 = arith.constant 0 : i32
    %2 = arith.cmpi ne, %1, %c0_i32_0 : i32
    scf.if %2 {
      %cst_9 = arith.constant 0.000000e+00 : f32
      %13 = vector.broadcast %cst_9 : f32 to vector<16x128xf32>
      %c0_10 = arith.constant 0 : index
      %c0_11 = arith.constant 0 : index
      %14 = vector.load %arg5[%c0_10, %c0_11] : memref<16x128xf32, #tpu.memory_space<vmem>>, vector<16x128xf32>
      tpu.vector_store %arg5[%c0_10, %c0_11], %13 {strides = array<i32>} : memref<16x128xf32, #tpu.memory_space<vmem>>, vector<16x128xf32>,
    } else {
    }
    %c0 = arith.constant 0 : index
    %c0_1 = arith.constant 0 : index
    %3 = vector.load %arg5[%c0, %c0_1] : memref<16x128xf32, #tpu.memory_space<vmem>>, vector<16x128xf32>
    %c0_2 = arith.constant 0 : index
    %c0_3 = arith.constant 0 : index
    %4 = vector.load %arg2[%c0_2, %c0_3] : memref<16x256xf32, #tpu.memory_space<vmem>>, vector<16x256xf32>
    %5 = arith.truncf %4 : vector<16x256xf32> to vector<16x256xbf16>
    %c0_4 = arith.constant 0 : index
    %c0_5 = arith.constant 0 : index
    %6 = vector.load %arg3[%c0_4, %c0_5] : memref<256x128xbf16, #tpu.memory_space<vmem>>, vector<256x128xbf16>
    %cst = arith.constant dense<0.000000e+00> : vector<16x128xf32>
    %7 = tpu.matmul %5, %6, %cst {dimension_numbers = #tpu.dot_dimension_numbers<[1], [0], [0], [1], [0, 0, 1, 1], [], []>} : vector<16x256xbf16>, vector<256x128xbf16>, vector<16x128xf32> -> vector<16x128xf32>
    %8 = arith.addf %3, %7 : vector<16x128xf32>
    %c0_6 = arith.constant 0 : index
    %c0_7 = arith.constant 0 : index
    %9 = vector.load %arg5[%c0_6, %c0_7] : memref<16x128xf32, #tpu.memory_space<vmem>>, vector<16x128xf32>
    tpu.vector_store %arg5[%c0_6, %c0_7], %8 {strides = array<i32>} : memref<16x128xf32, #tpu.memory_space<vmem>>, vector<16x128xf32>,
    %c3_i32 = arith.constant 3 : i32
    %10 = arith.cmpi eq, %arg1, %c3_i32 : i32
    %11 = arith.extui %10 : i1 to i32
    %c0_i32_8 = arith.constant 0 : i32
    %12 = arith.cmpi ne, %11, %c0_i32_8 : i32
    scf.if %12 {
      %c0_9 = arith.constant 0 : index
      %c0_10 = arith.constant 0 : index
      %13 = vector.load %arg5[%c0_9, %c0_10] : memref<16x128xf32, #tpu.memory_space<vmem>>, vector<16x128xf32>
      %c0_11 = arith.constant 0 : index
      %c0_12 = arith.constant 0 : index
      %14 = vector.load %arg4[%c0_11, %c0_12] : memref<1x128xf32, #tpu.memory_space<vmem>>, vector<1x128xf32>
      %15 = vector.broadcast %14 : vector<1x128xf32> to vector<16x128xf32>
      %16 = arith.addf %13, %15 : vector<16x128xf32>
      %cst_13 = arith.constant 0.000000e+00 : f32
      %17 = vector.broadcast %cst_13 : f32 to vector<16x128xf32>
      %18 = arith.maximumf %16, %17 : vector<16x128xf32>
      %c0_14 = arith.constant 0 : index
      %c0_15 = arith.constant 0 : index
      %19 = vector.load %arg5[%c0_14, %c0_15] : memref<16x128xf32, #tpu.memory_space<vmem>>, vector<16x128xf32>
      tpu.vector_store %arg5[%c0_14, %c0_15], %18 {strides = array<i32>} : memref<16x128xf32, #tpu.memory_space<vmem>>, vector<16x128xf32>,
    } else {
    }
    return
  }
  func.func @transform_0(%arg0: i32, %arg1: i32) -> (i32, i32) {
    %c0_i32 = arith.constant 0 : i32
    return %arg0, %arg1 : i32, i32
  }
  func.func @transform_1(%arg0: i32, %arg1: i32) -> (i32, i32) {
    %c0_i32 = arith.constant 0 : i32
    %c0_i32_0 = arith.constant 0 : i32
    return %arg1, %c0_i32 : i32, i32
  }
  func.func @transform_2(%arg0: i32, %arg1: i32) -> (i32, i32) {
    %c0_i32 = arith.constant 0 : i32
    %c0_i32_0 = arith.constant 0 : i32
    %c0_i32_1 = arith.constant 0 : i32
    return %c0_i32, %c0_i32_0 : i32, i32
  }
  func.func @transform_3(%arg0: i32, %arg1: i32) -> (i32, i32) {
    %c0_i32 = arith.constant 0 : i32
    %c0_i32_0 = arith.constant 0 : i32
    return %arg0, %c0_i32 : i32, i32
  }
}

</mosaic_0001>

<llo_original>
// kernel: tpu_custom_call.1
$region0: #{tpu_custom_call.1}
  #allocation0 [shape = 'u32[]', space=smem, size = 0x4, offset = 0x4, fixed_abs, tag = 'smem constant byte address 0x4 - core index']
  #allocation1 [shape = 'u32[72,128]{1,0:T(1,128)}', space=vmem, size = 0x9000, scoped, tag = 'internal scratch']
  %s0 = inlined_call_operand.hbm [shape: f32[16,1024], index: 0, kind: input, shape index: {}]
  %s1 = inlined_call_operand.hbm [shape: bf16[1024,128], index: 1, kind: input, shape index: {}]
  %s2 = inlined_call_operand.vmem [shape: f32[1,128], index: 2, kind: input, shape index: {}]
  %s3 = inlined_call_operand.hbm [shape: f32[16,128], index: 3, kind: output, shape index: {}]
  %s4 = sld [smem:[#allocation0]]
  $region61: #{tpu_custom_call.1} parent=0
    _
  %s6 = ssub.s32 1, %s4
  %s7 = scalar_select 0, %s6, %s4
  $region1: #{tpu_custom_call.1} parent=0
    #allocation2 [shape = 'u8[32768]{0}', space=vmem, size = 0x8000, scoped, tag = 'input window, operand 0']
    #allocation3 [shape = 's32[2]{0}', space=sflag, size = 0x8, scoped, tag = 'scoped memory for tpu_custom_call.1']
    #allocation4 [shape = 's32[2]{0}', space=sflag, size = 0x8, scoped, tag = 'scoped memory for tpu_custom_call.1']
    #allocation5 [shape = 'u8[131072]{0}', space=vmem, size = 0x20000, scoped, tag = 'input window, operand 1']
    #allocation6 [shape = 's32[2]{0}', space=sflag, size = 0x8, scoped, tag = 'scoped memory for tpu_custom_call.1']
    #allocation7 [shape = 'u8[8192]{0}', space=vmem, size = 0x2000, scoped, tag = 'output window, operand 0, single buffered']
    %8 = vsyncpa [#allocation3], 0
    %s9 = scalar_lea.sflag [#allocation3], 1
    %10 = vsyncpa %s9, 0
    %11 = vsyncpa [#allocation6], 0
    %s12 = scalar_lea.sflag [#allocation6], 1
    %13 = vsyncpa %s12, 0
    %14 = vsyncpa [#allocation4], 0
    loop: start=0, step=1, limit=6
    $region2: #{tpu_custom_call.1} parent=1 // loop_pre_header
      _
    $region3: #{tpu_custom_call.1} parent=1 // loop_header
      %s16 = sphi 0, %s20
      %p17 = scmp.ge.s32.totalorder %s16, 6
      %s23 = sphi 0, %s35
      %s24 = sphi 0, %s31
      %s25 = sphi 0, %s23
      %s26 = sphi 0, %s24
      %s27 = sphi 0, %s25
      %s28 = sphi 0, %s26
      %s40 = sphi 0, %s42
      %s43 = sphi 0, %s40
      %s44 = sphi 0, %s43
      %s60 = sphi 0, %s44
      %s66 = sphi 0, %s68
      %s69 = sphi 0, %s66
      %s70 = sphi 0, %s69
      %s86 = sphi 0, %s70
      %s90 = sphi 0, %s90
      %s92 = sphi 0, %s90
      %s93 = sphi 0, %s92
      %s107 = sphi 0, %s93
      %s113 = sphi 0, %s115
      %s116 = sphi 0, %s113
      %s117 = sphi 0, %s116
      %s133 = sphi 0, %s117
    $region4: #{tpu_custom_call.1} parent=1 // loop_header_branch
      %19 = sbr.rel (%p17) target = $region8
    $region5: #{tpu_custom_call.1} parent=1 // loop_body
      %s21 = ssub.s32 %s16, 1
      %s22 = ssub.s32 %s16, 2
      %s29 = sadd.s32 1, %s24
      %p30 = scmp.ge.s32.totalorder %s29, 4
      %s31 = scalar_select %p30, 0, %s29
      %s32 = sadd.s32 1, %s23
      %s33 = scalar_select %p30, %s32, %s23
      %p34 = scmp.ge.s32.totalorder %s33, 1
      %s35 = scalar_select %p34, 0, %s33
      %s36 = ssub.s32 %s23, %s35
      %s37 = ssub.s32 %s24, %s31
      %s38 = sor.u32 %s36, %s37
      %p39 = scmp.eq.s32.totalorder %s38, 0
      %s41 = sadd.s32 %s40, 1
      %s42 = scalar_select %p39, %s40, %s41
      %p45 = pneg %p39
      %p46 = scmp.eq.s32.totalorder %s16, 3
      %p47 = por %p45, %p46
      %p48 = scmp.ne.s32.totalorder %s40, %s43
      %p49 = scmp.eq.s32.totalorder %s16, 0
      %p50 = por %p48, %p49
      %p51 = scmp.ne.s32.totalorder %s40, %s43
      %p52 = scmp.eq.s32.totalorder %s21, 3
      %p53 = por %p51, %p52
      %p54 = scmp.ne.s32.totalorder %s43, %s44
      %p55 = scmp.eq.s32.totalorder %s21, 0
      %p56 = por %p54, %p55
      %p57 = scmp.ne.s32.totalorder %s43, %s44
      %p58 = scmp.eq.s32.totalorder %s22, 3
      %p59 = por %p57, %p58
      %p61 = scmp.ne.s32.totalorder %s44, %s60
      %p62 = scmp.eq.s32.totalorder %s22, 0
      %p63 = por %p61, %p62
      %s64 = ssub.s32 %s24, %s31
      %p65 = scmp.eq.s32.totalorder %s64, 0
      %s67 = sadd.s32 %s66, 1
      %s68 = scalar_select %p65, %s66, %s67
      %p71 = pneg %p65
      %p72 = scmp.eq.s32.totalorder %s16, 3
      %p73 = por %p71, %p72
      %p74 = scmp.ne.s32.totalorder %s66, %s69
      %p75 = scmp.eq.s32.totalorder %s16, 0
      %p76 = por %p74, %p75
      %p77 = scmp.ne.s32.totalorder %s66, %s69
      %p78 = scmp.eq.s32.totalorder %s21, 3
      %p79 = por %p77, %p78
      %p80 = scmp.ne.s32.totalorder %s69, %s70
      %p81 = scmp.eq.s32.totalorder %s21, 0
      %p82 = por %p80, %p81
      %p83 = scmp.ne.s32.totalorder %s69, %s70
      %p84 = scmp.eq.s32.totalorder %s22, 3
      %p85 = por %p83, %p84
      %p87 = scmp.ne.s32.totalorder %s70, %s86
      %p88 = scmp.eq.s32.totalorder %s22, 0
      %p89 = por %p87, %p88
      %s91 = sadd.s32 %s90, 1
      %p94 = scmp.eq.s32.totalorder %s16, 3
      %p95 = scmp.ne.s32.totalorder %s90, %s92
      %p96 = scmp.eq.s32.totalorder %s16, 0
      %p97 = por %p95, %p96
      %p98 = scmp.ne.s32.totalorder %s90, %s92
      %p99 = scmp.eq.s32.totalorder %s21, 3
      %p100 = por %p98, %p99
      %p101 = scmp.ne.s32.totalorder %s92, %s93
      %p102 = scmp.eq.s32.totalorder %s21, 0
      %p103 = por %p101, %p102
      %p104 = scmp.ne.s32.totalorder %s92, %s93
      %p105 = scmp.eq.s32.totalorder %s22, 3
      %p106 = por %p104, %p105
      %p108 = scmp.ne.s32.totalorder %s93, %s107
      %p109 = scmp.eq.s32.totalorder %s22, 0
      %p110 = por %p108, %p109
      %s111 = ssub.s32 %s23, %s35
      %p112 = scmp.eq.s32.totalorder %s111, 0
      %s114 = sadd.s32 %s113, 1
      %s115 = scalar_select %p112, %s113, %s114
      %p118 = pneg %p112
      %p119 = scmp.eq.s32.totalorder %s16, 3
      %p120 = por %p118, %p119
      %p121 = scmp.ne.s32.totalorder %s113, %s116
      %p122 = scmp.eq.s32.totalorder %s16, 0
      %p123 = por %p121, %p122
      %p124 = scmp.ne.s32.totalorder %s113, %s116
      %p125 = scmp.eq.s32.totalorder %s21, 3
      %p126 = por %p124, %p125
      %p127 = scmp.ne.s32.totalorder %s116, %s117
      %p128 = scmp.eq.s32.totalorder %s21, 0
      %p129 = por %p127, %p128
      %p130 = scmp.ne.s32.totalorder %s116, %s117
      %p131 = scmp.eq.s32.totalorder %s22, 3
      %p132 = por %p130, %p131
      %p134 = scmp.ne.s32.totalorder %s117, %s133
      %p135 = scmp.eq.s32.totalorder %s22, 0
      %p136 = por %p134, %p135
      %p137 = scmp.le.s32.totalorder 1, %s16
      %p138 = scmp.lt.s32.totalorder %s16, 5
      %p139 = pnand %p137, %p138
      %p140 = pneg %p139
      // Predicated region
      $region9: #{tpu_custom_call.1} parent=5 // pred_check
        _
      $region10: #{tpu_custom_call.1} parent=5 // pred_check_branch
        %142 = sbr.rel (%p139) target = $region12
      $region11: #{tpu_custom_call.1} parent=5 // pred_region
        %s143 = ssub.s32 %s16, 1
        // Predicated region
        $region13: #{tpu_custom_call.1} parent=11 // pred_check
          %p144 = pneg %p103
        $region14: #{tpu_custom_call.1} parent=11 // pred_check_branch
          %146 = sbr.rel (%p144) target = $region16
        $region15: #{tpu_custom_call.1} parent=11 // pred_region
          _
        $region16: #{tpu_custom_call.1} parent=11 // pred_fallthru
          _
      $region12: #{tpu_custom_call.1} parent=5 // pred_fallthru
        _
      %p147 = scmp.lt.s32.totalorder %s16, 4
      // Predicated region
      $region17: #{tpu_custom_call.1} parent=5 // pred_check
        %p148 = pneg %p147
      $region18: #{tpu_custom_call.1} parent=5 // pred_check_branch
        %150 = sbr.rel (%p148) target = $region20
      $region19: #{tpu_custom_call.1} parent=5 // pred_region
        // Predicated region
        $region21: #{tpu_custom_call.1} parent=19 // pred_check
          %p151 = pneg %p50
        $region22: #{tpu_custom_call.1} parent=19 // pred_check_branch
          %153 = sbr.rel (%p151) target = $region24
        $region23: #{tpu_custom_call.1} parent=19 // pred_region
          %s154 = sand.u32 %s40, 1
          %s155 = scalar_lea.sflag [#allocation3], %s154
          %s156 = sand.u32 %s40, 1
          %s157 = smul.addr %s156, 32
          %s158 = scalar_lea.vmem [#allocation2], %s157
          %s159 = smul.u32 2, %s23
          %s160 = smul.u32 2, %s24
          %162 = vsyncadd %s155, 0
          %s163 = smul.addr %s159, 8
          %s164 = sadd.s32 %s160, %s163
          %s165 = smul.addr %s164, 8
          %s166 = scalar_lea.hbm %s0, %s165
          %s167 = sshll.u32 %s166, 4
          %s168 = int_to_ptr.hbm [resolvable:$true] %s167
          %s169 = sshll.u32 %s158, 4
          %s170 = int_to_ptr.vmem [resolvable:$true] %s169
          %175 = dma.hbm_to_vmem [thread:$0]  %s168, 512, %s170, %s155, 1024, 256, 16
        $region24: #{tpu_custom_call.1} parent=19 // pred_fallthru
          _
        // Predicated region
        $region25: #{tpu_custom_call.1} parent=19 // pred_check
          %p176 = pneg %p76
        $region26: #{tpu_custom_call.1} parent=19 // pred_check_branch
          %178 = sbr.rel (%p176) target = $region28
        $region27: #{tpu_custom_call.1} parent=19 // pred_region
          %s179 = sand.u32 %s66, 1
          %s180 = scalar_lea.sflag [#allocation6], %s179
          %s181 = sand.u32 %s66, 1
          %s182 = smul.addr %s181, 128
          %s183 = scalar_lea.vmem [#allocation5], %s182
          %s184 = smul.u32 32, %s24
          %186 = vsyncadd %s180, 0
          %s187 = smul.addr %s184, 4
          %s188 = scalar_lea.hbm %s1, %s187
          %s189 = sshll.u32 %s188, 4
          %s190 = int_to_ptr.hbm [resolvable:$true] %s189
          %s191 = sshll.u32 %s183, 4
          %s192 = int_to_ptr.vmem [resolvable:$true] %s191
          %197 = dma.hbm_to_vmem [thread:$0]  %s190, 2048, %s192, %s180, 64, 64, 4
        $region28: #{tpu_custom_call.1} parent=19 // pred_fallthru
          _
      $region20: #{tpu_custom_call.1} parent=5 // pred_fallthru
        _
      %p198 = scmp.le.s32.totalorder 1, %s16
      %p199 = scmp.lt.s32.totalorder %s16, 5
      %p200 = pnand %p198, %p199
      %p201 = pneg %p200
      // Predicated region
      $region29: #{tpu_custom_call.1} parent=5 // pred_check
        _
      $region30: #{tpu_custom_call.1} parent=5 // pred_check_branch
        %203 = sbr.rel (%p200) target = $region32
      $region31: #{tpu_custom_call.1} parent=5 // pred_region
        %s204 = ssub.s32 %s16, 1
        %s205 = sand.u32 %s43, 1
        %s206 = scalar_lea.sflag [#allocation3], %s205
        %s207 = sand.u32 %s43, 1
        %s208 = smul.addr %s207, 32
        %s209 = scalar_lea.vmem [#allocation2], %s208
        // Predicated region
        $region33: #{tpu_custom_call.1} parent=31 // pred_check
          %p210 = pneg %p56
        $region34: #{tpu_custom_call.1} parent=31 // pred_check_branch
          %212 = sbr.rel (%p210) target = $region36
        $region35: #{tpu_custom_call.1} parent=31 // pred_region
          %214 = dma.done %s206, 512
        $region36: #{tpu_custom_call.1} parent=31 // pred_fallthru
          _
        %s215 = sand.u32 %s69, 1
        %s216 = scalar_lea.sflag [#allocation6], %s215
        %s217 = sand.u32 %s69, 1
        %s218 = smul.addr %s217, 128
        %s219 = scalar_lea.vmem [#allocation5], %s218
        // Predicated region
        $region37: #{tpu_custom_call.1} parent=31 // pred_check
          %p220 = pneg %p82
        $region38: #{tpu_custom_call.1} parent=31 // pred_check_branch
          %222 = sbr.rel (%p220) target = $region40
        $region39: #{tpu_custom_call.1} parent=31 // pred_region
          %224 = dma.done %s216, 2048
        $region40: #{tpu_custom_call.1} parent=31 // pred_fallthru
          _
        %s225 = sand.u32 %s43, 1
        %s226 = scalar_lea.sflag [#allocation3], %s225
        %s227 = sand.u32 %s43, 1
        %s228 = smul.addr %s227, 32
        %s229 = scalar_lea.vmem [#allocation2], %s228
        %p230 = pneg %p56
        %p231 = pneg %p53
        %s232 = sand.u32 %s69, 1
        %s233 = scalar_lea.sflag [#allocation6], %s232
        %s234 = sand.u32 %s69, 1
        %s235 = smul.addr %s234, 128
        %s236 = scalar_lea.vmem [#allocation5], %s235
        %p237 = pneg %p82
        %p238 = pneg %p79
        %p239 = pneg %p103
        %p240 = pneg %p100
        %p241 = pneg %p129
        %p242 = pneg %p126
        %s243 = smul.u32 2, %s25
        %s244 = smul.u32 2, %s26
        %s245 = smul.u32 32, %s26
        %s246 = smul.u32 2, %s25
        %p247 = scmp.eq.s32.totalorder %s26, 0
        // Predicated region
        $region41: #{tpu_custom_call.1} parent=31 // pred_check
          %p248 = pneg %p247
        $region42: #{tpu_custom_call.1} parent=31 // pred_check_branch
          %250 = sbr.rel (%p248) target = $region44
        $region43: #{tpu_custom_call.1} parent=31 // pred_region
          %251 = vst [vmem:[#allocation7] sm:$0xff] 0.0
          %252 = vst [vmem:[#allocation7 + $0x8] sm:$0xff] 0.0
        $region44: #{tpu_custom_call.1} parent=31 // pred_fallthru
          _
        %v253 = vld [vmem:[#allocation7] sm:$0xff]
        %v254 = vld [vmem:[#allocation7 + $0x8] sm:$0xff]
        %v255 = vld [vmem:[%s209] sm:$0xff]
        %v256 = vld [vmem:[%s209 + $0x8] sm:$0xff]
        %v257 = vld [vmem:[%s209 + $0x10] sm:$0xff]
        %v258 = vld [vmem:[%s209 + $0x18] sm:$0xff]
        %v259 = vpack.c.bf16 %v257, %v255
        %v260 = vpack.c.bf16 %v258, %v256
        %v261 = vld [vmem:[%s219] sm:$0xf]
        %v262 = vld [vmem:[%s219 + $0x4] sm:$0xf]
        %v263 = vld [vmem:[%s219 + $0x8] sm:$0xf]
        %v264 = vld [vmem:[%s219 + $0xc] sm:$0xf]
        %v265 = vld [vmem:[%s219 + $0x10] sm:$0xf]
        %v266 = vld [vmem:[%s219 + $0x14] sm:$0xf]
        %v267 = vld [vmem:[%s219 + $0x18] sm:$0xf]
        %v268 = vld [vmem:[%s219 + $0x1c] sm:$0xf]
        %v269 = vld [vmem:[%s219 + $0x20] sm:$0xf]
        %v270 = vld [vmem:[%s219 + $0x24] sm:$0xf]
        %v271 = vld [vmem:[%s219 + $0x28] sm:$0xf]
        %v272 = vld [vmem:[%s219 + $0x2c] sm:$0xf]
        %v273 = vld [vmem:[%s219 + $0x30] sm:$0xf]
        %v274 = vld [vmem:[%s219 + $0x34] sm:$0xf]
        %v275 = vld [vmem:[%s219 + $0x38] sm:$0xf]
        %v276 = vld [vmem:[%s219 + $0x3c] sm:$0xf]
        %v277 = vld [vmem:[%s219 + $0x40] sm:$0xf]
        %v278 = vld [vmem:[%s219 + $0x44] sm:$0xf]
        %v279 = vld [vmem:[%s219 + $0x48] sm:$0xf]
        %v280 = vld [vmem:[%s219 + $0x4c] sm:$0xf]
        %v281 = vld [vmem:[%s219 + $0x50] sm:$0xf]
        %v282 = vld [vmem:[%s219 + $0x54] sm:$0xf]
        %v283 = vld [vmem:[%s219 + $0x58] sm:$0xf]
        %v284 = vld [vmem:[%s219 + $0x5c] sm:$0xf]
        %v285 = vld [vmem:[%s219 + $0x60] sm:$0xf]
        %v286 = vld [vmem:[%s219 + $0x64] sm:$0xf]
        %v287 = vld [vmem:[%s219 + $0x68] sm:$0xf]
        %v288 = vld [vmem:[%s219 + $0x6c] sm:$0xf]
        %v289 = vld [vmem:[%s219 + $0x70] sm:$0xf]
        %v290 = vld [vmem:[%s219 + $0x74] sm:$0xf]
        %v291 = vld [vmem:[%s219 + $0x78] sm:$0xf]
        %v292 = vld [vmem:[%s219 + $0x7c] sm:$0xf]
        %v325 = vunpack.c.l.b16 %v261
        %v326 = vunpack.c.l.b16 %v262
        %v327 = vunpack.c.l.b16 %v263
        %v328 = vunpack.c.l.b16 %v264
        %v329 = vunpack.c.l.b16 %v265
        %v330 = vunpack.c.l.b16 %v266
        %v331 = vunpack.c.l.b16 %v267
        %v332 = vunpack.c.l.b16 %v268
        %v333 = vunpack.c.l.b16 %v269
        %v334 = vunpack.c.l.b16 %v270
        %v335 = vunpack.c.l.b16 %v271
        %v336 = vunpack.c.l.b16 %v272
        %v337 = vunpack.c.l.b16 %v273
        %v338 = vunpack.c.l.b16 %v274
        %v339 = vunpack.c.l.b16 %v275
        %v340 = vunpack.c.l.b16 %v276
        %v341 = vunpack.c.l.b16 %v277
        %v342 = vunpack.c.l.b16 %v278
        %v343 = vunpack.c.l.b16 %v279
        %v344 = vunpack.c.l.b16 %v280
        %v345 = vunpack.c.l.b16 %v281
        %v346 = vunpack.c.l.b16 %v282
        %v347 = vunpack.c.l.b16 %v283
        %v348 = vunpack.c.l.b16 %v284
        %v349 = vunpack.c.l.b16 %v285
        %v350 = vunpack.c.l.b16 %v286
        %v351 = vunpack.c.l.b16 %v287
        %v352 = vunpack.c.l.b16 %v288
        %v353 = vunpack.c.l.b16 %v289
        %v354 = vunpack.c.l.b16 %v290
        %v355 = vunpack.c.l.b16 %v291
        %v356 = vunpack.c.l.b16 %v292
        %v357 = vpack.c.b16 %v326, %v325
        %v358 = vpack.c.b16 %v328, %v327
        %v359 = vpack.c.b16 %v330, %v329
        %v360 = vpack.c.b16 %v332, %v331
        %v361 = vpack.c.b16 %v334, %v333
        %v362 = vpack.c.b16 %v336, %v335
        %v363 = vpack.c.b16 %v338, %v337
        %v364 = vpack.c.b16 %v340, %v339
        %v365 = vpack.c.b16 %v342, %v341
        %v366 = vpack.c.b16 %v344, %v343
        %v367 = vpack.c.b16 %v346, %v345
        %v368 = vpack.c.b16 %v348, %v347
        %v369 = vpack.c.b16 %v350, %v349
        %v370 = vpack.c.b16 %v352, %v351
        %v371 = vpack.c.b16 %v354, %v353
        %v372 = vpack.c.b16 %v356, %v355
        %389 = vmatpush.bf16.msra.mxu0 %v364
        %390 = vmatpush.bf16.msra.mxu0 %v363
        %391 = vmatpush.bf16.msra.mxu0 %v362
        %392 = vmatpush.bf16.msra.mxu0 %v361
        %393 = vmatpush.bf16.msra.mxu0 %v360
        %394 = vmatpush.bf16.msra.mxu0 %v359
        %395 = vmatpush.bf16.msra.mxu0 %v358
        %396 = vmatpush.bf16.msra.mxu0 %v357
        %397 = vmatmul.bf16.gmra.mxu0 %v259
        %v398 = vpop.f32.mrf.mxu0
        %v399 = vadd.f32 0.0, %v398
        %v400 = vpop.f32.mrf.mxu0
        %v401 = vadd.f32 0.0, %v400
        %402 = vdwg.mxu0
        %403 = vmatpush.bf16.msra.mxu0 %v372
        %404 = vmatpush.bf16.msra.mxu0 %v371
        %405 = vmatpush.bf16.msra.mxu0 %v370
        %406 = vmatpush.bf16.msra.mxu0 %v369
        %407 = vmatpush.bf16.msra.mxu0 %v368
        %408 = vmatpush.bf16.msra.mxu0 %v367
        %409 = vmatpush.bf16.msra.mxu0 %v366
        %410 = vmatpush.bf16.msra.mxu0 %v365
        %411 = vmatmul.bf16.gmra.mxu0 %v260
        %v412 = vpop.f32.mrf.mxu0
        %v413 = vadd.f32 %v399, %v412
        %v414 = vpop.f32.mrf.mxu0
        %v415 = vadd.f32 %v401, %v414
        %416 = vdwg.mxu0
        %v417 = vadd.f32 %v253, %v413
        %v418 = vadd.f32 %v254, %v415
        %419 = vst [vmem:[#allocation7] sm:$0xff] %v417
        %420 = vst [vmem:[#allocation7 + $0x8] sm:$0xff] %v418
        %p421 = scmp.eq.s32.totalorder %s26, 3
        // Predicated region
        $region45: #{tpu_custom_call.1} parent=31 // pred_check
          %p422 = pneg %p421
        $region46: #{tpu_custom_call.1} parent=31 // pred_check_branch
          %424 = sbr.rel (%p422) target = $region48
        $region47: #{tpu_custom_call.1} parent=31 // pred_region
          %v425 = vld [vmem:[#allocation7] sm:$0xff]
          %v426 = vld [vmem:[#allocation7 + $0x8] sm:$0xff]
          %v427 = vld [vmem:[%s2] sm:$0x1]
          %v429 = vperm.slane %v427, 0
          %v431 = vadd.f32 %v425, %v429
          %v432 = vadd.f32 %v426, %v429
          %v433 = vmax.f32 %v431, 0.0
          %v434 = vmax.f32 %v432, 0.0
          %435 = vst [vmem:[#allocation7] sm:$0xff] %v433
          %436 = vst [vmem:[#allocation7 + $0x8] sm:$0xff] %v434
        $region48: #{tpu_custom_call.1} parent=31 // pred_fallthru
          _
        // Predicated region
        $region49: #{tpu_custom_call.1} parent=31 // pred_check
          %p437 = pneg %p126
        $region50: #{tpu_custom_call.1} parent=31 // pred_check_branch
          %439 = sbr.rel (%p437) target = $region52
        $region51: #{tpu_custom_call.1} parent=31 // pred_region
          %s440 = smul.u32 2, %s25
          %442 = vsyncadd [#allocation4], 0
          %s443 = smul.addr %s440, 8
          %s444 = scalar_lea.hbm %s3, %s443
          %s445 = sshll.u32 [#allocation7], 4
          %s446 = int_to_ptr.vmem [resolvable:$true] %s445
          %s447 = sshll.u32 %s444, 4
          %s448 = int_to_ptr.hbm [resolvable:$true] %s447
          %453 = dma.vmem_to_hbm [thread:$0]  %s446, 256, %s448, [#allocation4], 128, 128, 8
        $region52: #{tpu_custom_call.1} parent=31 // pred_fallthru
          _
        // Predicated region
        $region53: #{tpu_custom_call.1} parent=31 // pred_check
          %p454 = pneg %p126
        $region54: #{tpu_custom_call.1} parent=31 // pred_check_branch
          %456 = sbr.rel (%p454) target = $region56
        $region55: #{tpu_custom_call.1} parent=31 // pred_region
          %458 = dma.done [#allocation4], 256
        $region56: #{tpu_custom_call.1} parent=31 // pred_fallthru
          _
      $region32: #{tpu_custom_call.1} parent=5 // pred_fallthru
        _
      %p459 = scmp.le.s32.totalorder 2, %s16
      // Predicated region
      $region57: #{tpu_custom_call.1} parent=5 // pred_check
        %p460 = pneg %p459
      $region58: #{tpu_custom_call.1} parent=5 // pred_check_branch
        %462 = sbr.rel (%p460) target = $region60
      $region59: #{tpu_custom_call.1} parent=5 // pred_region
        %s463 = ssub.s32 %s16, 2
      $region60: #{tpu_custom_call.1} parent=5 // pred_fallthru
        _
    $region6: #{tpu_custom_call.1} parent=1 // loop_footer
      %s20 = sadd.s32 1, %s16
    $region7: #{tpu_custom_call.1} parent=1 // loop_footer_branch
      %15 = sbr.rel target = $region3
    $region8: #{tpu_custom_call.1} parent=1 // loop_exit
      _
    %464 = vsyncpa [#allocation3], 1
    %s465 = scalar_lea.sflag [#allocation3], 1
    %466 = vsyncpa %s465, 1
    %467 = vsyncpa [#allocation6], 1
    %s468 = scalar_lea.sflag [#allocation6], 1
    %469 = vsyncpa %s468, 1
    %470 = vsyncpa [#allocation4], 1
    %s471 = scalar_lea.sflag [#allocation4], 1
    %472 = vsyncpa %s471, 1

</llo_original>
